<compile_context>
chip_gen: v6e
topology: v6e:2x2x1
jax: 0.10.0
libtpu: 0.0.40
codegen_flags: <defaults>
</compile_context>

<pallas_src>
import functools

import jax
import jax.numpy as jnp
from jax.experimental import pallas as pl
from jax.experimental.pallas import tpu as pltpu

IN_FEATURES = 28 * 28   # 784
HIDDEN = 256
OUT_FEATURES = 10
PAD_OUT = 128           # lane-dense padded class dim
NEG_INF = -1e30         # padded-logit bias; exp(NEG_INF - m) underflows to 0


def _round_up(x, m):
    return (x + m - 1) // m * m


def _mlp_softmax_kernel(x_ref, w1_ref, b1_ref, w2_ref, b2_ref, o_ref):
    # x_ref:  (TB, 784)  bf16      w1_ref: (784, 256) bf16   b1_ref: (1, 256) f32
    # w2_ref: (256, 128) bf16      b2_ref: (1, 128)   f32    o_ref:  (TB, 128) f32
    # Linear(784 -> 256) + ReLU; bf16 MXU matmul, f32 accumulation.
    h = jnp.dot(x_ref[...], w1_ref[...], preferred_element_type=jnp.float32)
    h = jnp.maximum(h + b1_ref[...], 0.0)
    # Linear(256 -> 128 padded); padded columns of w2 are zero.
    logits = jnp.dot(h.astype(w2_ref.dtype), w2_ref[...],
                     preferred_element_type=jnp.float32)
    logits = logits + b2_ref[...]          # padded lanes get -1e30
    # Numerically stable softmax in f32 over the 128-lane class axis.
    m = jnp.max(logits, axis=-1, keepdims=True)
    e = jnp.exp(logits - m)                # padded lanes -> exactly 0
    denom = jnp.sum(e, axis=-1, keepdims=True)
    o_ref[...] = (e / denom).astype(o_ref.dtype)


@functools.partial(jax.jit, static_argnames=("block_b",))
def feed_forward_net(x_nchw, w1, b1, w2, b2, *, block_b=512):
    """Pallas equivalent of FeedForwardNet.forward.

    x_nchw: (B, 1, 28, 28) float32
    w1: (784, 256), b1: (256,), w2: (256, 10), b2: (10,)  (f32, PyTorch layout^T)
    returns: (B, 10) softmax probabilities (float32)
    """
    B = x_nchw.shape[0]
    x_flat = x_nchw.reshape(B, -1).astype(jnp.bfloat16)   # nn.Flatten + bf16

    # Batch tiling: pick the number of tiles first, then a tile size that is a
    # multiple of 8 sublanes, so padding never exceeds one tile minus the
    # sublane remainder (e.g. B=600 -> 2 tiles of 304, 8 padded rows).
    n_tiles = pl.cdiv(B, block_b)
    tb = _round_up(pl.cdiv(B, n_tiles), 8)
    b_pad = n_tiles * tb
    if b_pad != B:
        x_flat = jnp.pad(x_flat, ((0, b_pad - B), (0, 0)))

    # bf16 weights (MXU-native, half HBM traffic); biases stay f32.
    w1_bf = w1.astype(jnp.bfloat16)
    b1_2d = b1.reshape(1, HIDDEN).astype(jnp.float32)
    # Lane-dense class padding: zero weight columns, -1e30 bias in padded slots.
    w2_pad = jnp.zeros((HIDDEN, PAD_OUT), jnp.bfloat16)
    w2_pad = w2_pad.at[:, :OUT_FEATURES].set(w2.astype(jnp.bfloat16))
    b2_pad = jnp.full((1, PAD_OUT), NEG_INF, jnp.float32)
    b2_pad = b2_pad.at[0, :OUT_FEATURES].set(b2.astype(jnp.float32))

    out = pl.pallas_call(
        _mlp_softmax_kernel,
        out_shape=jax.ShapeDtypeStruct((b_pad, PAD_OUT), jnp.float32),
        grid_spec=pltpu.PrefetchScalarGridSpec(
            num_scalar_prefetch=0,
            grid=(n_tiles,),
            in_specs=[
                # x: streamed per batch tile (pipelined HBM->VMEM DMA)
                pl.BlockSpec((tb, IN_FEATURES), lambda i: (i, 0)),
                # weights / biases: same block for every i -> VMEM-resident
                pl.BlockSpec((IN_FEATURES, HIDDEN), lambda i: (0, 0)),
                pl.BlockSpec((1, HIDDEN), lambda i: (0, 0)),
                pl.BlockSpec((HIDDEN, PAD_OUT), lambda i: (0, 0)),
                pl.BlockSpec((1, PAD_OUT), lambda i: (0, 0)),
            ],
            out_specs=pl.BlockSpec((tb, PAD_OUT), lambda i: (i, 0)),
        ),
        compiler_params=pltpu.CompilerParams(
            dimension_semantics=("parallel",),      # megacore on multi-TC chips
            vmem_limit_bytes=32 * 1024 * 1024,      # portable to v7x VMEM
        ),
    )(x_flat, w1_bf, b1_2d, w2_pad, b2_pad)

    # Drop batch padding and padded class lanes.
    return out[:B, :OUT_FEATURES]


def init_params(key):
    """Deterministic parameter init (synthetic; mimics nn.Linear shapes)."""
    k1, k2, k3, k4 = jax.random.split(key, 4)
    bound1 = 1.0 / jnp.sqrt(jnp.float32(IN_FEATURES))
    bound2 = 1.0 / jnp.sqrt(jnp.float32(HIDDEN))
    w1 = jax.random.uniform(k1, (IN_FEATURES, HIDDEN), jnp.float32,
                            -bound1, bound1)
    b1 = jax.random.uniform(k2, (HIDDEN,), jnp.float32, -bound1, bound1)
    w2 = jax.random.uniform(k3, (HIDDEN, OUT_FEATURES), jnp.float32,
                            -bound2, bound2)
    b2 = jax.random.uniform(k4, (OUT_FEATURES,), jnp.float32, -bound2, bound2)
    return w1, b1, w2, b2


if __name__ == "__main__":
    key = jax.random.PRNGKey(0)
    k_x, k_p = jax.random.split(key)
    # Small batch, MNIST-like input shape implied by nn.Linear(28*28, 256)
    x = jax.random.normal(k_x, (2, 1, 28, 28), jnp.float32)
    w1, b1, w2, b2 = init_params(k_p)

    out = feed_forward_net(x, w1, b1, w2, b2)
    out = jax.block_until_ready(out)

    # sanity: shape + softmax rows sum to 1 (padded lanes contribute 0) + match
    # a pure-JAX reference of the PyTorch forward (bf16 matmul tolerance).
    assert out.shape == (2, 10)
    assert jnp.allclose(jnp.sum(out, axis=1), 1.0, atol=1e-5)
    assert bool(jnp.all(jnp.isfinite(out)))
    ref_h = jnp.maximum(x.reshape(2, -1) @ w1 + b1, 0.0)
    ref = jax.nn.softmax(ref_h @ w2 + b2, axis=-1)
    assert jnp.allclose(out, ref, atol=5e-2)
    print("KERNEL_OK")
</pallas_src>

<mosaic_0001>
module attributes {stable_mosaic.version = 11 : i64} {
  func.func @_mlp_softmax_kernel(%arg0: i32, %arg1: memref<8x784xbf16, #tpu.memory_space<vmem>>, %arg2: memref<784x256xbf16, #tpu.memory_space<vmem>>, %arg3: memref<1x256xf32, #tpu.memory_space<vmem>>, %arg4: memref<256x128xbf16, #tpu.memory_space<vmem>>, %arg5: memref<1x128xf32, #tpu.memory_space<vmem>>, %arg6: memref<8x128xf32, #tpu.memory_space<vmem>>) attributes {dimension_semantics = [#tpu.dimension_semantics<parallel>], iteration_bounds = array<i64: 1>, scalar_prefetch = 0 : i64, scratch_operands = 0 : i64, tpu.core_type = #tpu.core_type<tc>, window_params = [{transform_indices = @transform_0, window_bounds = array<i64: 8, 784>}, {pipeline_mode = #tpu.pipeline_mode<synchronous>, transform_indices = @transform_1, window_bounds = array<i64: 784, 256>}, {pipeline_mode = #tpu.pipeline_mode<synchronous>, transform_indices = @transform_2, window_bounds = array<i64: 1, 256>}, {pipeline_mode = #tpu.pipeline_mode<synchronous>, transform_indices = @transform_3, window_bounds = array<i64: 256, 128>}, {pipeline_mode = #tpu.pipeline_mode<synchronous>, transform_indices = @transform_4, window_bounds = array<i64: 1, 128>}, {transform_indices = @transform_5, window_bounds = array<i64: 8, 128>}]} {
    %c0 = arith.constant 0 : index
    %c0_0 = arith.constant 0 : index
    %0 = vector.load %arg1[%c0, %c0_0] : memref<8x784xbf16, #tpu.memory_space<vmem>>, vector<8x784xbf16>
    %c0_1 = arith.constant 0 : index
    %c0_2 = arith.constant 0 : index
    %1 = vector.load %arg2[%c0_1, %c0_2] : memref<784x256xbf16, #tpu.memory_space<vmem>>, vector<784x256xbf16>
    %cst = arith.constant dense<0.000000e+00> : vector<8x256xf32>
    %2 = tpu.matmul %0, %1, %cst {dimension_numbers = #tpu.dot_dimension_numbers<[1], [0], [0], [1], [0, 0, 1, 1], [], []>} : vector<8x784xbf16>, vector<784x256xbf16>, vector<8x256xf32> -> vector<8x256xf32>
    %c0_3 = arith.constant 0 : index
    %c0_4 = arith.constant 0 : index
    %3 = vector.load %arg3[%c0_3, %c0_4] : memref<1x256xf32, #tpu.memory_space<vmem>>, vector<1x256xf32>
    %4 = vector.broadcast %3 : vector<1x256xf32> to vector<8x256xf32>
    %5 = arith.addf %2, %4 : vector<8x256xf32>
    %cst_5 = arith.constant 0.000000e+00 : f32
    %6 = vector.broadcast %cst_5 : f32 to vector<8x256xf32>
    %7 = arith.maximumf %5, %6 : vector<8x256xf32>
    %8 = arith.truncf %7 : vector<8x256xf32> to vector<8x256xbf16>
    %c0_6 = arith.constant 0 : index
    %c0_7 = arith.constant 0 : index
    %9 = vector.load %arg4[%c0_6, %c0_7] : memref<256x128xbf16, #tpu.memory_space<vmem>>, vector<256x128xbf16>
    %cst_8 = arith.constant dense<0.000000e+00> : vector<8x128xf32>
    %10 = tpu.matmul %8, %9, %cst_8 {dimension_numbers = #tpu.dot_dimension_numbers<[1], [0], [0], [1], [0, 0, 1, 1], [], []>} : vector<8x256xbf16>, vector<256x128xbf16>, vector<8x128xf32> -> vector<8x128xf32>
    %c0_9 = arith.constant 0 : index
    %c0_10 = arith.constant 0 : index
    %11 = vector.load %arg5[%c0_9, %c0_10] : memref<1x128xf32, #tpu.memory_space<vmem>>, vector<1x128xf32>
    %12 = vector.broadcast %11 : vector<1x128xf32> to vector<8x128xf32>
    %13 = arith.addf %10, %12 : vector<8x128xf32>
    %cst_11 = arith.constant dense<0xFF800000> : vector<8xf32>
    %14 = vector.multi_reduction <maximumf>, %13, %cst_11 [1] : vector<8x128xf32> to vector<8xf32>
    %15 = vector.shape_cast %14 : vector<8xf32> to vector<8x1xf32>
    %16 = vector.broadcast %15 : vector<8x1xf32> to vector<8x128xf32>
    %17 = arith.subf %13, %16 : vector<8x128xf32>
    %18 = math.exp %17 : vector<8x128xf32>
    %cst_12 = arith.constant dense<0.000000e+00> : vector<8xf32>
    %19 = vector.multi_reduction <add>, %18, %cst_12 [1] : vector<8x128xf32> to vector<8xf32>
    %20 = vector.shape_cast %19 : vector<8xf32> to vector<8x1xf32>
    %21 = vector.broadcast %20 : vector<8x1xf32> to vector<8x128xf32>
    %22 = arith.divf %18, %21 : vector<8x128xf32>
    %c0_13 = arith.constant 0 : index
    %c0_14 = arith.constant 0 : index
    %23 = vector.load %arg6[%c0_13, %c0_14] : memref<8x128xf32, #tpu.memory_space<vmem>>, vector<8x128xf32>
    tpu.vector_store %arg6[%c0_13, %c0_14], %22 {strides = array<i32>} : memref<8x128xf32, #tpu.memory_space<vmem>>, vector<8x128xf32>,
    return
  }
  func.func @transform_0(%arg0: i32) -> (i32, i32) {
    %c0_i32 = arith.constant 0 : i32
    %c0_i32_0 = arith.constant 0 : i32
    return %arg0, %c0_i32 : i32, i32
  }
  func.func @transform_1(%arg0: i32) -> (i32, i32) {
    %c0_i32 = arith.constant 0 : i32
    %c0_i32_0 = arith.constant 0 : i32
    %c0_i32_1 = arith.constant 0 : i32
    return %c0_i32, %c0_i32_0 : i32, i32
  }
  func.func @transform_2(%arg0: i32) -> (i32, i32) {
    %c0_i32 = arith.constant 0 : i32
    %c0_i32_0 = arith.constant 0 : i32
    %c0_i32_1 = arith.constant 0 : i32
    return %c0_i32, %c0_i32_0 : i32, i32
  }
  func.func @transform_3(%arg0: i32) -> (i32, i32) {
    %c0_i32 = arith.constant 0 : i32
    %c0_i32_0 = arith.constant 0 : i32
    %c0_i32_1 = arith.constant 0 : i32
    return %c0_i32, %c0_i32_0 : i32, i32
  }
  func.func @transform_4(%arg0: i32) -> (i32, i32) {
    %c0_i32 = arith.constant 0 : i32
    %c0_i32_0 = arith.constant 0 : i32
    %c0_i32_1 = arith.constant 0 : i32
    return %c0_i32, %c0_i32_0 : i32, i32
  }
  func.func @transform_5(%arg0: i32) -> (i32, i32) {
    %c0_i32 = arith.constant 0 : i32
    %c0_i32_0 = arith.constant 0 : i32
    return %arg0, %c0_i32 : i32, i32
  }
}

</mosaic_0001>

<llo_original>
// kernel: feed_forward_net.1
$region0: #{feed_forward_net.1}
  #allocation0 [shape = 'u32[]', space=smem, size = 0x4, offset = 0x4, fixed_abs, tag = 'smem constant byte address 0x4 - core index']
  #allocation1 [shape = 'u32[144,128]{1,0:T(1,128)}', space=vmem, size = 0x12000, scoped, tag = 'internal scratch']
  %s0 = inlined_call_operand.vmem [shape: bf16[8,784], index: 0, kind: input, shape index: {}]
  %s1 = inlined_call_operand.vmem [shape: bf16[784,256], index: 1, kind: input, shape index: {}]
  %s2 = inlined_call_operand.vmem [shape: f32[1,256], index: 2, kind: input, shape index: {}]
  %s3 = inlined_call_operand.vmem [shape: bf16[256,128], index: 3, kind: input, shape index: {}]
  %s4 = inlined_call_operand.vmem [shape: f32[1,128], index: 4, kind: input, shape index: {}]
  %s5 = inlined_call_operand.vmem [shape: f32[8,128], index: 5, kind: output, shape index: {}]
  %s6 = sld [smem:[#allocation0]]
  $region30: #{feed_forward_net.1} parent=0
    _
  %s8 = ssub.s32 1, %s6
  %s9 = scalar_select 0, %s8, %s6
  // Predicated region
  $region2: #{feed_forward_net.1} parent=0 // pred_check
    _
  $region3: #{feed_forward_net.1} parent=0 // pred_check_branch
    %11 = sbr.rel (0) target = $region5
  $region4: #{feed_forward_net.1} parent=0 // pred_region
    _
  $region5: #{feed_forward_net.1} parent=0 // pred_fallthru
    _
  // Predicated region
  $region6: #{feed_forward_net.1} parent=0 // pred_check
    _
  $region7: #{feed_forward_net.1} parent=0 // pred_check_branch
    %13 = sbr.rel (0) target = $region9
  $region8: #{feed_forward_net.1} parent=0 // pred_region
    _
  $region9: #{feed_forward_net.1} parent=0 // pred_fallthru
    _
  // Predicated region
  $region10: #{feed_forward_net.1} parent=0 // pred_check
    _
  $region11: #{feed_forward_net.1} parent=0 // pred_check_branch
    %15 = sbr.rel (0) target = $region13
  $region12: #{feed_forward_net.1} parent=0 // pred_region
    _
  $region13: #{feed_forward_net.1} parent=0 // pred_fallthru
    _
  // Predicated region
  $region14: #{feed_forward_net.1} parent=0 // pred_check
    _
  $region15: #{feed_forward_net.1} parent=0 // pred_check_branch
    %17 = sbr.rel (0) target = $region17
  $region16: #{feed_forward_net.1} parent=0 // pred_region
    _
  $region17: #{feed_forward_net.1} parent=0 // pred_fallthru
    _
  // Predicated region
  $region18: #{feed_forward_net.1} parent=0 // pred_check
    _
  $region19: #{feed_forward_net.1} parent=0 // pred_check_branch
    %19 = sbr.rel (0) target = $region21
  $region20: #{feed_forward_net.1} parent=0 // pred_region
    _
  $region21: #{feed_forward_net.1} parent=0 // pred_fallthru
    _
  %v21 = vld [vmem:[%s0] sm:$0xff]
  %v22 = vld [vmem:[%s0 + $0x8] sm:$0xff]
  %v23 = vld [vmem:[%s0 + $0x10] sm:$0xff]
  %v24 = vld [vmem:[%s0 + $0x18] sm:$0xf]
  %v25 = vld [vmem:[%s1] sm:$0xff]
  %v26 = vld [vmem:[%s1 + $0x8] sm:$0xff]
  %v27 = vld [vmem:[%s1 + $0x10] sm:$0xff]
  %v28 = vld [vmem:[%s1 + $0x18] sm:$0xff]
  %v29 = vld [vmem:[%s1 + $0x20] sm:$0xff]
  %v30 = vld [vmem:[%s1 + $0x28] sm:$0xff]
  %v31 = vld [vmem:[%s1 + $0x30] sm:$0xff]
  %v32 = vld [vmem:[%s1 + $0x38] sm:$0xff]
  %v33 = vld [vmem:[%s1 + $0x40] sm:$0xff]
  %v34 = vld [vmem:[%s1 + $0x48] sm:$0xff]
  %v35 = vld [vmem:[%s1 + $0x50] sm:$0xff]
  %v36 = vld [vmem:[%s1 + $0x58] sm:$0xff]
  %v37 = vld [vmem:[%s1 + $0x60] sm:$0xff]
  %v38 = vld [vmem:[%s1 + $0x68] sm:$0xff]
  %v39 = vld [vmem:[%s1 + $0x70] sm:$0xff]
  %v40 = vld [vmem:[%s1 + $0x78] sm:$0xff]
  %v41 = vld [vmem:[%s1 + $0x80] sm:$0xff]
  %v42 = vld [vmem:[%s1 + $0x88] sm:$0xff]
  %v43 = vld [vmem:[%s1 + $0x90] sm:$0xff]
  %v44 = vld [vmem:[%s1 + $0x98] sm:$0xff]
  %v45 = vld [vmem:[%s1 + $0xa0] sm:$0xff]
  %v46 = vld [vmem:[%s1 + $0xa8] sm:$0xff]
  %v47 = vld [vmem:[%s1 + $0xb0] sm:$0xff]
  %v48 = vld [vmem:[%s1 + $0xb8] sm:$0xff]
  %v49 = vld [vmem:[%s1 + $0xc0] sm:$0xff]
  %v50 = vld [vmem:[%s1 + $0xc8] sm:$0xff]
  %v51 = vld [vmem:[%s1 + $0xd0] sm:$0xff]
  %v52 = vld [vmem:[%s1 + $0xd8] sm:$0xff]
  %v53 = vld [vmem:[%s1 + $0xe0] sm:$0xff]
  %v54 = vld [vmem:[%s1 + $0xe8] sm:$0xff]
  %v55 = vld [vmem:[%s1 + $0xf0] sm:$0xff]
  %v56 = vld [vmem:[%s1 + $0xf8] sm:$0xff]
  %v57 = vld [vmem:[%s1 + $0x100] sm:$0xff]
  %v58 = vld [vmem:[%s1 + $0x108] sm:$0xff]
  %v59 = vld [vmem:[%s1 + $0x110] sm:$0xff]
  %v60 = vld [vmem:[%s1 + $0x118] sm:$0xff]
  %v61 = vld [vmem:[%s1 + $0x120] sm:$0xff]
  %v62 = vld [vmem:[%s1 + $0x128] sm:$0xff]
  %v63 = vld [vmem:[%s1 + $0x130] sm:$0xff]
  %v64 = vld [vmem:[%s1 + $0x138] sm:$0xff]
  %v65 = vld [vmem:[%s1 + $0x140] sm:$0xff]
  %v66 = vld [vmem:[%s1 + $0x148] sm:$0xff]
  %v67 = vld [vmem:[%s1 + $0x150] sm:$0xff]
  %v68 = vld [vmem:[%s1 + $0x158] sm:$0xff]
  %v69 = vld [vmem:[%s1 + $0x160] sm:$0xff]
  %v70 = vld [vmem:[%s1 + $0x168] sm:$0xff]
  %v71 = vld [vmem:[%s1 + $0x170] sm:$0xff]
  %v72 = vld [vmem:[%s1 + $0x178] sm:$0xff]
  %v73 = vld [vmem:[%s1 + $0x180] sm:$0xff]
  %v74 = vld [vmem:[%s1 + $0x188] sm:$0xff]
  %v75 = vld [vmem:[%s1 + $0x190] sm:$0xff]
  %v76 = vld [vmem:[%s1 + $0x198] sm:$0xff]
  %v77 = vld [vmem:[%s1 + $0x1a0] sm:$0xff]
  %v78 = vld [vmem:[%s1 + $0x1a8] sm:$0xff]
  %v79 = vld [vmem:[%s1 + $0x1b0] sm:$0xff]
  %v80 = vld [vmem:[%s1 + $0x1b8] sm:$0xff]
  %v81 = vld [vmem:[%s1 + $0x1c0] sm:$0xff]
  %v82 = vld [vmem:[%s1 + $0x1c8] sm:$0xff]
  %v83 = vld [vmem:[%s1 + $0x1d0] sm:$0xff]
  %v84 = vld [vmem:[%s1 + $0x1d8] sm:$0xff]
  %v85 = vld [vmem:[%s1 + $0x1e0] sm:$0xff]
  %v86 = vld [vmem:[%s1 + $0x1e8] sm:$0xff]
  %v87 = vld [vmem:[%s1 + $0x1f0] sm:$0xff]
  %v88 = vld [vmem:[%s1 + $0x1f8] sm:$0xff]
  %v89 = vld [vmem:[%s1 + $0x200] sm:$0xff]
  %v90 = vld [vmem:[%s1 + $0x208] sm:$0xff]
  %v91 = vld [vmem:[%s1 + $0x210] sm:$0xff]
  %v92 = vld [vmem:[%s1 + $0x218] sm:$0xff]
  %v93 = vld [vmem:[%s1 + $0x220] sm:$0xff]
  %v94 = vld [vmem:[%s1 + $0x228] sm:$0xff]
  %v95 = vld [vmem:[%s1 + $0x230] sm:$0xff]
  %v96 = vld [vmem:[%s1 + $0x238] sm:$0xff]
  %v97 = vld [vmem:[%s1 + $0x240] sm:$0xff]
  %v98 = vld [vmem:[%s1 + $0x248] sm:$0xff]
  %v99 = vld [vmem:[%s1 + $0x250] sm:$0xff]
  %v100 = vld [vmem:[%s1 + $0x258] sm:$0xff]
  %v101 = vld [vmem:[%s1 + $0x260] sm:$0xff]
  %v102 = vld [vmem:[%s1 + $0x268] sm:$0xff]
  %v103 = vld [vmem:[%s1 + $0x270] sm:$0xff]
  %v104 = vld [vmem:[%s1 + $0x278] sm:$0xff]
  %v105 = vld [vmem:[%s1 + $0x280] sm:$0xff]
  %v106 = vld [vmem:[%s1 + $0x288] sm:$0xff]
  %v107 = vld [vmem:[%s1 + $0x290] sm:$0xff]
  %v108 = vld [vmem:[%s1 + $0x298] sm:$0xff]
  %v109 = vld [vmem:[%s1 + $0x2a0] sm:$0xff]
  %v110 = vld [vmem:[%s1 + $0x2a8] sm:$0xff]
  %v111 = vld [vmem:[%s1 + $0x2b0] sm:$0xff]
  %v112 = vld [vmem:[%s1 + $0x2b8] sm:$0xff]
  %v113 = vld [vmem:[%s1 + $0x2c0] sm:$0xff]
  %v114 = vld [vmem:[%s1 + $0x2c8] sm:$0xff]
  %v115 = vld [vmem:[%s1 + $0x2d0] sm:$0xff]
  %v116 = vld [vmem:[%s1 + $0x2d8] sm:$0xff]
  %v117 = vld [vmem:[%s1 + $0x2e0] sm:$0xff]
  %v118 = vld [vmem:[%s1 + $0x2e8] sm:$0xff]
  %v119 = vld [vmem:[%s1 + $0x2f0] sm:$0xff]
  %v120 = vld [vmem:[%s1 + $0x2f8] sm:$0xff]
  %v121 = vld [vmem:[%s1 + $0x300] sm:$0xff]
  %v122 = vld [vmem:[%s1 + $0x308] sm:$0xff]
  %v123 = vld [vmem:[%s2] sm:$0x3]
  %v125 = vlaneseq
  %v126 = vshrl.u32 %v125, 7
  %v127 = vsub.s32 0, %v126
  %v128 = vrot.slane %v123, %v127
  %v129 = vlaneseq
  %v130 = vshrl.u32 %v129, 7
  %v131 = vsub.s32 1, %v130
  %v132 = vrot.slane %v123, %v131
  %v139 = vunpack.c.l.b16 %v21
  %v140 = vunpack.c.h.b16 %v21
  %v141 = vunpack.c.l.b16 %v22
  %v142 = vunpack.c.h.b16 %v22
  %v143 = vunpack.c.l.b16 %v23
  %v144 = vunpack.c.h.b16 %v23
  %v145 = vunpack.c.l.b16 %v24
  %v146 = vpack.c.b16 %v139, %v139
  %v147 = vpack.c.b16 %v140, %v140
  %v148 = vpack.c.b16 %v141, %v141
  %v149 = vpack.c.b16 %v142, %v142
  %v150 = vpack.c.b16 %v143, %v143
  %v151 = vpack.c.b16 %v144, %v144
  %v152 = vpack.c.b16 %v145, %v145
  %v257 = vunpack.c.l.b16 %v25
  %v258 = vunpack.c.h.b16 %v25
  %v259 = vunpack.c.l.b16 %v26
  %v260 = vunpack.c.h.b16 %v26
  %v261 = vunpack.c.l.b16 %v27
  %v262 = vunpack.c.h.b16 %v27
  %v263 = vunpack.c.l.b16 %v28
  %v264 = vunpack.c.h.b16 %v28
  %v265 = vunpack.c.l.b16 %v29
  %v266 = vunpack.c.h.b16 %v29
  %v267 = vunpack.c.l.b16 %v30
  %v268 = vunpack.c.h.b16 %v30
  %v269 = vunpack.c.l.b16 %v31
  %v270 = vunpack.c.h.b16 %v31
  %v271 = vunpack.c.l.b16 %v32
  %v272 = vunpack.c.h.b16 %v32
  %v273 = vunpack.c.l.b16 %v33
  %v274 = vunpack.c.h.b16 %v33
  %v275 = vunpack.c.l.b16 %v34
  %v276 = vunpack.c.h.b16 %v34
  %v277 = vunpack.c.l.b16 %v35
  %v278 = vunpack.c.h.b16 %v35
  %v279 = vunpack.c.l.b16 %v36
  %v280 = vunpack.c.h.b16 %v36
  %v281 = vunpack.c.l.b16 %v37
  %v282 = vunpack.c.h.b16 %v37
  %v283 = vunpack.c.l.b16 %v38
  %v284 = vunpack.c.h.b16 %v38
  %v285 = vunpack.c.l.b16 %v39
  %v286 = vunpack.c.h.b16 %v39
  %v287 = vunpack.c.l.b16 %v40
  %v288 = vunpack.c.h.b16 %v40
  %v289 = vunpack.c.l.b16 %v41
  %v290 = vunpack.c.h.b16 %v41
  %v291 = vunpack.c.l.b16 %v42
  %v292 = vunpack.c.h.b16 %v42
  %v293 = vunpack.c.l.b16 %v43
  %v294 = vunpack.c.h.b16 %v43
  %v295 = vunpack.c.l.b16 %v44
  %v296 = vunpack.c.h.b16 %v44
  %v297 = vunpack.c.l.b16 %v45
  %v298 = vunpack.c.h.b16 %v45
  %v299 = vunpack.c.l.b16 %v46
  %v300 = vunpack.c.h.b16 %v46
  %v301 = vunpack.c.l.b16 %v47
  %v302 = vunpack.c.h.b16 %v47
  %v303 = vunpack.c.l.b16 %v48
  %v304 = vunpack.c.h.b16 %v48
  %v305 = vunpack.c.l.b16 %v49
  %v306 = vunpack.c.h.b16 %v49
  %v307 = vunpack.c.l.b16 %v50
  %v308 = vunpack.c.h.b16 %v50
  %v309 = vunpack.c.l.b16 %v51
  %v310 = vunpack.c.h.b16 %v51
  %v311 = vunpack.c.l.b16 %v52
  %v312 = vunpack.c.h.b16 %v52
  %v313 = vunpack.c.l.b16 %v53
  %v314 = vunpack.c.h.b16 %v53
  %v315 = vunpack.c.l.b16 %v54
  %v316 = vunpack.c.h.b16 %v54
  %v317 = vunpack.c.l.b16 %v55
  %v318 = vunpack.c.h.b16 %v55
  %v319 = vunpack.c.l.b16 %v56
  %v320 = vunpack.c.h.b16 %v56
  %v321 = vunpack.c.l.b16 %v57
  %v322 = vunpack.c.h.b16 %v57
  %v323 = vunpack.c.l.b16 %v58
  %v324 = vunpack.c.h.b16 %v58
  %v325 = vunpack.c.l.b16 %v59
  %v326 = vunpack.c.h.b16 %v59
  %v327 = vunpack.c.l.b16 %v60
  %v328 = vunpack.c.h.b16 %v60
  %v329 = vunpack.c.l.b16 %v61
  %v330 = vunpack.c.h.b16 %v61
  %v331 = vunpack.c.l.b16 %v62
  %v332 = vunpack.c.h.b16 %v62
  %v333 = vunpack.c.l.b16 %v63
  %v334 = vunpack.c.h.b16 %v63
  %v335 = vunpack.c.l.b16 %v64
  %v336 = vunpack.c.h.b16 %v64
  %v337 = vunpack.c.l.b16 %v65
  %v338 = vunpack.c.h.b16 %v65
  %v339 = vunpack.c.l.b16 %v66
  %v340 = vunpack.c.h.b16 %v66
  %v341 = vunpack.c.l.b16 %v67
  %v342 = vunpack.c.h.b16 %v67
  %v343 = vunpack.c.l.b16 %v68
  %v344 = vunpack.c.h.b16 %v68
  %v345 = vunpack.c.l.b16 %v69
  %v346 = vunpack.c.h.b16 %v69
  %v347 = vunpack.c.l.b16 %v70
  %v348 = vunpack.c.h.b16 %v70
  %v349 = vunpack.c.l.b16 %v71
  %v350 = vunpack.c.h.b16 %v71
  %v351 = vunpack.c.l.b16 %v72
  %v352 = vunpack.c.h.b16 %v72
  %v353 = vunpack.c.l.b16 %v73
  %v354 = vunpack.c.h.b16 %v73
  %v355 = vunpack.c.l.b16 %v74
  %v356 = vunpack.c.h.b16 %v74
  %v357 = vunpack.c.l.b16 %v75
  %v358 = vunpack.c.h.b16 %v75
  %v359 = vunpack.c.l.b16 %v76
  %v360 = vunpack.c.h.b16 %v76
  %v361 = vunpack.c.l.b16 %v77
  %v362 = vunpack.c.h.b16 %v77
  %v363 = vunpack.c.l.b16 %v78
  %v364 = vunpack.c.h.b16 %v78
  %v365 = vunpack.c.l.b16 %v79
  %v366 = vunpack.c.h.b16 %v79
  %v367 = vunpack.c.l.b16 %v80
  %v368 = vunpack.c.h.b16 %v80
  %v369 = vunpack.c.l.b16 %v81
  %v370 = vunpack.c.h.b16 %v81
  %v371 = vunpack.c.l.b16 %v82
  %v372 = vunpack.c.h.b16 %v82
  %v373 = vunpack.c.l.b16 %v83
  %v374 = vunpack.c.h.b16 %v83
  %v375 = vunpack.c.l.b16 %v84
  %v376 = vunpack.c.h.b16 %v84
  %v377 = vunpack.c.l.b16 %v85
  %v378 = vunpack.c.h.b16 %v85
  %v379 = vunpack.c.l.b16 %v86
  %v380 = vunpack.c.h.b16 %v86
  %v381 = vunpack.c.l.b16 %v87
  %v382 = vunpack.c.h.b16 %v87
  %v383 = vunpack.c.l.b16 %v88
  %v384 = vunpack.c.h.b16 %v88
  %v385 = vunpack.c.l.b16 %v89
  %v386 = vunpack.c.h.b16 %v89
  %v387 = vunpack.c.l.b16 %v90
  %v388 = vunpack.c.h.b16 %v90
  %v389 = vunpack.c.l.b16 %v91
  %v390 = vunpack.c.h.b16 %v91
  %v391 = vunpack.c.l.b16 %v92
  %v392 = vunpack.c.h.b16 %v92
  %v393 = vunpack.c.l.b16 %v93
  %v394 = vunpack.c.h.b16 %v93
  %v395 = vunpack.c.l.b16 %v94
  %v396 = vunpack.c.h.b16 %v94
  %v397 = vunpack.c.l.b16 %v95
  %v398 = vunpack.c.h.b16 %v95
  %v399 = vunpack.c.l.b16 %v96
  %v400 = vunpack.c.h.b16 %v96
  %v401 = vunpack.c.l.b16 %v97
  %v402 = vunpack.c.h.b16 %v97
  %v403 = vunpack.c.l.b16 %v98
  %v404 = vunpack.c.h.b16 %v98
  %v405 = vunpack.c.l.b16 %v99
  %v406 = vunpack.c.h.b16 %v99
  %v407 = vunpack.c.l.b16 %v100
  %v408 = vunpack.c.h.b16 %v100
  %v409 = vunpack.c.l.b16 %v101
  %v410 = vunpack.c.h.b16 %v101
  %v411 = vunpack.c.l.b16 %v102
  %v412 = vunpack.c.h.b16 %v102
  %v413 = vunpack.c.l.b16 %v103
  %v414 = vunpack.c.h.b16 %v103
  %v415 = vunpack.c.l.b16 %v104
  %v416 = vunpack.c.h.b16 %v104
  %v417 = vunpack.c.l.b16 %v105
  %v418 = vunpack.c.h.b16 %v105
  %v419 = vunpack.c.l.b16 %v106
  %v420 = vunpack.c.h.b16 %v106
  %v421 = vunpack.c.l.b16 %v107
  %v422 = vunpack.c.h.b16 %v107
  %v423 = vunpack.c.l.b16 %v108
  %v424 = vunpack.c.h.b16 %v108
  %v425 = vunpack.c.l.b16 %v109
  %v426 = vunpack.c.h.b16 %v109
  %v427 = vunpack.c.l.b16 %v110
  %v428 = vunpack.c.h.b16 %v110
  %v429 = vunpack.c.l.b16 %v111
  %v430 = vunpack.c.h.b16 %v111
  %v431 = vunpack.c.l.b16 %v112
  %v432 = vunpack.c.h.b16 %v112
  %v433 = vunpack.c.l.b16 %v113
  %v434 = vunpack.c.h.b16 %v113
  %v435 = vunpack.c.l.b16 %v114
  %v436 = vunpack.c.h.b16 %v114
  %v437 = vunpack.c.l.b16 %v115
  %v438 = vunpack.c.h.b16 %v115
  %v439 = vunpack.c.l.b16 %v116
  %v440 = vunpack.c.h.b16 %v116
  %v441 = vunpack.c.l.b16 %v117
  %v442 = vunpack.c.h.b16 %v117
  %v443 = vunpack.c.l.b16 %v118
  %v444 = vunpack.c.h.b16 %v118
  %v445 = vunpack.c.l.b16 %v119
  %v446 = vunpack.c.h.b16 %v119
  %v447 = vunpack.c.l.b16 %v120
  %v448 = vunpack.c.h.b16 %v120
  %v449 = vunpack.c.l.b16 %v121
  %v450 = vunpack.c.h.b16 %v121
  %v451 = vunpack.c.l.b16 %v122
  %v452 = vunpack.c.h.b16 %v122
  %v453 = vpack.c.b16 %v259, %v257
  %v454 = vpack.c.b16 %v260, %v258
  %v455 = vpack.c.b16 %v263, %v261
  %v456 = vpack.c.b16 %v264, %v262
  %v457 = vpack.c.b16 %v267, %v265
  %v458 = vpack.c.b16 %v268, %v266
  %v459 = vpack.c.b16 %v271, %v269
  %v460 = vpack.c.b16 %v272, %v270
  %v461 = vpack.c.b16 %v275, %v273
  %v462 = vpack.c.b16 %v276, %v274
  %v463 = vpack.c.b16 %v279, %v277
  %v464 = vpack.c.b16 %v280, %v278
  %v465 = vpack.c.b16 %v283, %v281
  %v466 = vpack.c.b16 %v284, %v282
  %v467 = vpack.c.b16 %v287, %v285
  %v468 = vpack.c.b16 %v288, %v286
  %v469 = vpack.c.b16 %v291, %v289
  %v470 = vpack.c.b16 %v292, %v290
  %v471 = vpack.c.b16 %v295, %v293
  %v472 = vpack.c.b16 %v296, %v294
  %v473 = vpack.c.b16 %v299, %v297
  %v474 = vpack.c.b16 %v300, %v298
  %v475 = vpack.c.b16 %v303, %v301
  %v476 = vpack.c.b16 %v304, %v302
  %v477 = vpack.c.b16 %v307, %v305
  %v478 = vpack.c.b16 %v308, %v306
  %v479 = vpack.c.b16 %v311, %v309
  %v480 = vpack.c.b16 %v312, %v310
  %v481 = vpack.c.b16 %v315, %v313
  %v482 = vpack.c.b16 %v316, %v314
  %v483 = vpack.c.b16 %v319, %v317
  %v484 = vpack.c.b16 %v320, %v318
  %v485 = vpack.c.b16 %v323, %v321
  %v486 = vpack.c.b16 %v324, %v322
  %v487 = vpack.c.b16 %v327, %v325
  %v488 = vpack.c.b16 %v328, %v326
  %v489 = vpack.c.b16 %v331, %v329
  %v490 = vpack.c.b16 %v332, %v330
  %v491 = vpack.c.b16 %v335, %v333
  %v492 = vpack.c.b16 %v336, %v334
  %v493 = vpack.c.b16 %v339, %v337
  %v494 = vpack.c.b16 %v340, %v338
  %v495 = vpack.c.b16 %v343, %v341
  %v496 = vpack.c.b16 %v344, %v342
  %v497 = vpack.c.b16 %v347, %v345
  %v498 = vpack.c.b16 %v348, %v346
  %v499 = vpack.c.b16 %v351, %v349
  %v500 = vpack.c.b16 %v352, %v350
  %v501 = vpack.c.b16 %v355, %v353
  %v502 = vpack.c.b16 %v356, %v354
  %v503 = vpack.c.b16 %v359, %v357
  %v504 = vpack.c.b16 %v360, %v358
  %v505 = vpack.c.b16 %v363, %v361
  %v506 = vpack.c.b16 %v364, %v362
  %v507 = vpack.c.b16 %v367, %v365
  %v508 = vpack.c.b16 %v368, %v366
  %v509 = vpack.c.b16 %v371, %v369
  %v510 = vpack.c.b16 %v372, %v370
  %v511 = vpack.c.b16 %v375, %v373
  %v512 = vpack.c.b16 %v376, %v374
  %v513 = vpack.c.b16 %v379, %v377
  %v514 = vpack.c.b16 %v380, %v378
  %v515 = vpack.c.b16 %v383, %v381
  %v516 = vpack.c.b16 %v384, %v382
  %v517 = vpack.c.b16 %v387, %v385
  %v518 = vpack.c.b16 %v388, %v386
  %v519 = vpack.c.b16 %v391, %v389
  %v520 = vpack.c.b16 %v392, %v390
  %v521 = vpack.c.b16 %v395, %v393
  %v522 = vpack.c.b16 %v396, %v394
  %v523 = vpack.c.b16 %v399, %v397
  %v524 = vpack.c.b16 %v400, %v398
  %v525 = vpack.c.b16 %v403, %v401
  %v526 = vpack.c.b16 %v404, %v402
  %v527 = vpack.c.b16 %v407, %v405
  %v528 = vpack.c.b16 %v408, %v406
  %v529 = vpack.c.b16 %v411, %v409
  %v530 = vpack.c.b16 %v412, %v410
  %v531 = vpack.c.b16 %v415, %v413
  %v532 = vpack.c.b16 %v416, %v414
  %v533 = vpack.c.b16 %v419, %v417
  %v534 = vpack.c.b16 %v420, %v418
  %v535 = vpack.c.b16 %v423, %v421
  %v536 = vpack.c.b16 %v424, %v422
  %v537 = vpack.c.b16 %v427, %v425
  %v538 = vpack.c.b16 %v428, %v426
  %v539 = vpack.c.b16 %v431, %v429
  %v540 = vpack.c.b16 %v432, %v430
  %v541 = vpack.c.b16 %v435, %v433
  %v542 = vpack.c.b16 %v436, %v434
  %v543 = vpack.c.b16 %v439, %v437
  %v544 = vpack.c.b16 %v440, %v438
  %v545 = vpack.c.b16 %v443, %v441
  %v546 = vpack.c.b16 %v444, %v442
  %v547 = vpack.c.b16 %v447, %v445
  %v548 = vpack.c.b16 %v448, %v446
  %v549 = vpack.c.b16 %v451, %v449
  %v550 = vpack.c.b16 %v452, %v450
  %vm649 = vcmask 130048
  %v651 = vsel %vm649, %v152, 0
  %653 = vmatprep.subr.bf16.mxu0 %v468
  %654 = vmatpush1.bf16.msra.mxu0 %v467
  %655 = vmatprep.subr.bf16.mxu0 %v466
  %656 = vmatpush1.bf16.msra.mxu0 %v465
  %657 = vmatprep.subr.bf16.mxu0 %v464
  %658 = vmatpush1.bf16.msra.mxu0 %v463
  %659 = vmatprep.subr.bf16.mxu0 %v462
  %660 = vmatpush1.bf16.msra.mxu0 %v461
  %661 = vmatprep.subr.bf16.mxu0 %v460
  %662 = vmatpush1.bf16.msra.mxu0 %v459
  %663 = vmatprep.subr.bf16.mxu0 %v458
  %664 = vmatpush1.bf16.msra.mxu0 %v457
  %665 = vmatprep.subr.bf16.mxu0 %v456
  %666 = vmatpush1.bf16.msra.mxu0 %v455
  %667 = vmatprep.subr.bf16.mxu0 %v454
  %668 = vmatpush1.bf16.msra.mxu0 %v453
  %669 = vmatprep.subr.bf16.mxu0 %v484
  %670 = vmatpush2.bf16.msra.mxu0 %v483
  %671 = vmatprep.subr.bf16.mxu0 %v482
  %672 = vmatpush2.bf16.msra.mxu0 %v481
  %673 = vmatprep.subr.bf16.mxu0 %v480
  %674 = vmatpush2.bf16.msra.mxu0 %v479
  %675 = vmatprep.subr.bf16.mxu0 %v478
  %676 = vmatpush2.bf16.msra.mxu0 %v477
  %677 = vmatprep.subr.bf16.mxu0 %v476
  %678 = vmatpush2.bf16.msra.mxu0 %v475
  %679 = vmatprep.subr.bf16.mxu0 %v474
  %680 = vmatpush2.bf16.msra.mxu0 %v473
  %681 = vmatprep.subr.bf16.mxu0 %v472
  %682 = vmatpush2.bf16.msra.mxu0 %v471
  %683 = vmatprep.subr.bf16.mxu0 %v470
  %684 = vmatpush2.bf16.msra.mxu0 %v469
  %685 = vmatprep.mubr.bf16.mxu0 %v147
  %686 = vmatmul.mubr.bf16.gmra.mxu0 %v146
  %v687 = vpop.f32.mrf.mxu0
  %v688 = vadd.f32 %v128, %v687
  %v689 = vpop.f32.mrf.mxu0
  %v690 = vadd.f32 %v132, %v689
  %v691 = vpop.f32.mrf.mxu0
  %v692 = vpop.f32.mrf.mxu0
  %693 = vdwg.mxu0
  %694 = vmatprep.subr.bf16.mxu0 %v500
  %695 = vmatpush1.bf16.msra.mxu0 %v499
  %696 = vmatprep.subr.bf16.mxu0 %v498
  %697 = vmatpush1.bf16.msra.mxu0 %v497
  %698 = vmatprep.subr.bf16.mxu0 %v496
  %699 = vmatpush1.bf16.msra.mxu0 %v495
  %700 = vmatprep.subr.bf16.mxu0 %v494
  %701 = vmatpush1.bf16.msra.mxu0 %v493
  %702 = vmatprep.subr.bf16.mxu0 %v492
  %703 = vmatpush1.bf16.msra.mxu0 %v491
  %704 = vmatprep.subr.bf16.mxu0 %v490
  %705 = vmatpush1.bf16.msra.mxu0 %v489
  %706 = vmatprep.subr.bf16.mxu0 %v488
  %707 = vmatpush1.bf16.msra.mxu0 %v487
  %708 = vmatprep.subr.bf16.mxu0 %v486
  %709 = vmatpush1.bf16.msra.mxu0 %v485
  %710 = vmatprep.subr.bf16.mxu0 %v516
  %711 = vmatpush2.bf16.msra.mxu0 %v515
  %712 = vmatprep.subr.bf16.mxu0 %v514
  %713 = vmatpush2.bf16.msra.mxu0 %v513
  %714 = vmatprep.subr.bf16.mxu0 %v512
  %715 = vmatpush2.bf16.msra.mxu0 %v511
  %716 = vmatprep.subr.bf16.mxu0 %v510
  %717 = vmatpush2.bf16.msra.mxu0 %v509
  %718 = vmatprep.subr.bf16.mxu0 %v508
  %719 = vmatpush2.bf16.msra.mxu0 %v507
  %720 = vmatprep.subr.bf16.mxu0 %v506
  %721 = vmatpush2.bf16.msra.mxu0 %v505
  %722 = vmatprep.subr.bf16.mxu0 %v504
  %723 = vmatpush2.bf16.msra.mxu0 %v503
  %724 = vmatprep.subr.bf16.mxu0 %v502
  %725 = vmatpush2.bf16.msra.mxu0 %v501
  %726 = vmatprep.mubr.bf16.mxu0 %v149
  %727 = vmatmul.mubr.bf16.gmra.mxu0 %v148
  %v728 = vpop.f32.mrf.mxu0
  %v729 = vadd.f32 %v688, %v728
  %v730 = vpop.f32.mrf.mxu0
  %v731 = vadd.f32 %v690, %v730
  %v732 = vpop.f32.mrf.mxu0
  %v733 = vpop.f32.mrf.mxu0
  %734 = vdwg.mxu0
  %735 = vmatprep.subr.bf16.mxu0 %v532
  %736 = vmatpush1.bf16.msra.mxu0 %v531
  %737 = vmatprep.subr.bf16.mxu0 %v530
  %738 = vmatpush1.bf16.msra.mxu0 %v529
  %739 = vmatprep.subr.bf16.mxu0 %v528
  %740 = vmatpush1.bf16.msra.mxu0 %v527
  %741 = vmatprep.subr.bf16.mxu0 %v526
  %742 = vmatpush1.bf16.msra.mxu0 %v525
  %743 = vmatprep.subr.bf16.mxu0 %v524
  %744 = vmatpush1.bf16.msra.mxu0 %v523
  %745 = vmatprep.subr.bf16.mxu0 %v522
  %746 = vmatpush1.bf16.msra.mxu0 %v521
  %747 = vmatprep.subr.bf16.mxu0 %v520
  %748 = vmatpush1.bf16.msra.mxu0 %v519
  %749 = vmatprep.subr.bf16.mxu0 %v518
  %750 = vmatpush1.bf16.msra.mxu0 %v517
  %751 = vmatprep.subr.bf16.mxu0 %v548
  %752 = vmatpush2.bf16.msra.mxu0 %v547
  %753 = vmatprep.subr.bf16.mxu0 %v546
  %754 = vmatpush2.bf16.msra.mxu0 %v545
  %755 = vmatprep.subr.bf16.mxu0 %v544
  %756 = vmatpush2.bf16.msra.mxu0 %v543
  %757 = vmatprep.subr.bf16.mxu0 %v542
  %758 = vmatpush2.bf16.msra.mxu0 %v541
  %759 = vmatprep.subr.bf16.mxu0 %v540
  %760 = vmatpush2.bf16.msra.mxu0 %v539
  %761 = vmatprep.subr.bf16.mxu0 %v538
  %762 = vmatpush2.bf16.msra.mxu0 %v537
  %763 = vmatprep.subr.bf16.mxu0 %v536
  %764 = vmatpush2.bf16.msra.mxu0 %v535
  %765 = vmatprep.subr.bf16.mxu0 %v534
  %766 = vmatpush2.bf16.msra.mxu0 %v533
  %767 = vmatprep.mubr.bf16.mxu0 %v151
  %768 = vmatmul.mubr.bf16.gmra.mxu0 %v150
  %v769 = vpop.f32.mrf.mxu0
  %v770 = vadd.f32 %v729, %v769
  %v771 = vpop.f32.mrf.mxu0
  %v772 = vadd.f32 %v731, %v771
  %v773 = vpop.f32.mrf.mxu0
  %v774 = vpop.f32.mrf.mxu0
  %775 = vdwg.mxu0
  %776 = vmatprep.subr.bf16.mxu0 0
  %777 = vmatpush1.bf16.msra.mxu0 0
  %778 = vmatprep.subr.bf16.mxu0 0
  %779 = vmatpush1.bf16.msra.mxu0 0
  %780 = vmatprep.subr.bf16.mxu0 0
  %781 = vmatpush1.bf16.msra.mxu0 0
  %782 = vmatprep.subr.bf16.mxu0 0
  %783 = vmatpush1.bf16.msra.mxu0 0
  %784 = vmatprep.subr.bf16.mxu0 0
  %785 = vmatpush1.bf16.msra.mxu0 0
  %786 = vmatprep.subr.bf16.mxu0 0
  %787 = vmatpush1.bf16.msra.mxu0 0
  %788 = vmatprep.subr.bf16.mxu0 0
  %789 = vmatpush1.bf16.msra.mxu0 0
  %790 = vmatprep.subr.bf16.mxu0 %v550
  %791 = vmatpush1.bf16.msra.mxu0 %v549
  %792 = vmatprep.subr.bf16.mxu0 0
  %793 = vmatpush2.bf16.msra.mxu0 0
  %794 = vmatprep.subr.bf16.mxu0 0
  %795 = vmatpush2.bf16.msra.mxu0 0
  %796 = vmatprep.subr.bf16.mxu0 0
  %797 = vmatpush2.bf16.msra.mxu0 0
  %798 = vmatprep.subr.bf16.mxu0 0
  %799 = vmatpush2.bf16.msra.mxu0 0
  %800 = vmatprep.subr.bf16.mxu0 0
  %801 = vmatpush2.bf16.msra.mxu0 0
  %802 = vmatprep.subr.bf16.mxu0 0
  %803 = vmatpush2.bf16.msra.mxu0 0
  %804 = vmatprep.subr.bf16.mxu0 0
  %805 = vmatpush2.bf16.msra.mxu0 0
  %806 = vmatprep.subr.bf16.mxu0 0
  %807 = vmatpush2.bf16.msra.mxu0 0
  %808 = vmatprep.mubr.bf16.mxu0 0
  %809 = vmatmul.mubr.bf16.gmra.mxu0 %v651
  %v810 = vpop.f32.mrf.mxu0
  %v811 = vadd.f32 %v770, %v810
  %v812 = vpop.f32.mrf.mxu0
  %v813 = vadd.f32 %v772, %v812
  %v814 = vpop.f32.mrf.mxu0
  %v815 = vpop.f32.mrf.mxu0
  %816 = vdwg.mxu0
  %v817 = vmax.f32 %v811, 0.0
  %v818 = vmax.f32 %v813, 0.0
  %v819 = vpack.c.bf16 %v817, %v817
  %v820 = vpack.c.bf16 %v818, %v818
  %v821 = vld [vmem:[%s3] sm:$0xf]
  %v822 = vld [vmem:[%s3 + $0x4] sm:$0xf]
  %v823 = vld [vmem:[%s3 + $0x8] sm:$0xf]
  %v824 = vld [vmem:[%s3 + $0xc] sm:$0xf]
  %v825 = vld [vmem:[%s3 + $0x10] sm:$0xf]
  %v826 = vld [vmem:[%s3 + $0x14] sm:$0xf]
  %v827 = vld [vmem:[%s3 + $0x18] sm:$0xf]
  %v828 = vld [vmem:[%s3 + $0x1c] sm:$0xf]
  %v829 = vld [vmem:[%s3 + $0x20] sm:$0xf]
  %v830 = vld [vmem:[%s3 + $0x24] sm:$0xf]
  %v831 = vld [vmem:[%s3 + $0x28] sm:$0xf]
  %v832 = vld [vmem:[%s3 + $0x2c] sm:$0xf]
  %v833 = vld [vmem:[%s3 + $0x30] sm:$0xf]
  %v834 = vld [vmem:[%s3 + $0x34] sm:$0xf]
  %v835 = vld [vmem:[%s3 + $0x38] sm:$0xf]
  %v836 = vld [vmem:[%s3 + $0x3c] sm:$0xf]
  %v837 = vld [vmem:[%s3 + $0x40] sm:$0xf]
  %v838 = vld [vmem:[%s3 + $0x44] sm:$0xf]
  %v839 = vld [vmem:[%s3 + $0x48] sm:$0xf]
  %v840 = vld [vmem:[%s3 + $0x4c] sm:$0xf]
  %v841 = vld [vmem:[%s3 + $0x50] sm:$0xf]
  %v842 = vld [vmem:[%s3 + $0x54] sm:$0xf]
  %v843 = vld [vmem:[%s3 + $0x58] sm:$0xf]
  %v844 = vld [vmem:[%s3 + $0x5c] sm:$0xf]
  %v845 = vld [vmem:[%s3 + $0x60] sm:$0xf]
  %v846 = vld [vmem:[%s3 + $0x64] sm:$0xf]
  %v847 = vld [vmem:[%s3 + $0x68] sm:$0xf]
  %v848 = vld [vmem:[%s3 + $0x6c] sm:$0xf]
  %v849 = vld [vmem:[%s3 + $0x70] sm:$0xf]
  %v850 = vld [vmem:[%s3 + $0x74] sm:$0xf]
  %v851 = vld [vmem:[%s3 + $0x78] sm:$0xf]
  %v852 = vld [vmem:[%s3 + $0x7c] sm:$0xf]
  %v853 = vld [vmem:[%s4] sm:$0x1]
  %v855 = vlaneseq
  %v856 = vshrl.u32 %v855, 7
  %v857 = vsub.s32 0, %v856
  %v858 = vrot.slane %v853, %v857
  %v892 = vunpack.c.l.b16 %v821
  %v893 = vunpack.c.l.b16 %v822
  %v894 = vunpack.c.l.b16 %v823
  %v895 = vunpack.c.l.b16 %v824
  %v896 = vunpack.c.l.b16 %v825
  %v897 = vunpack.c.l.b16 %v826
  %v898 = vunpack.c.l.b16 %v827
  %v899 = vunpack.c.l.b16 %v828
  %v900 = vunpack.c.l.b16 %v829
  %v901 = vunpack.c.l.b16 %v830
  %v902 = vunpack.c.l.b16 %v831
  %v903 = vunpack.c.l.b16 %v832
  %v904 = vunpack.c.l.b16 %v833
  %v905 = vunpack.c.l.b16 %v834
  %v906 = vunpack.c.l.b16 %v835
  %v907 = vunpack.c.l.b16 %v836
  %v908 = vunpack.c.l.b16 %v837
  %v909 = vunpack.c.l.b16 %v838
  %v910 = vunpack.c.l.b16 %v839
  %v911 = vunpack.c.l.b16 %v840
  %v912 = vunpack.c.l.b16 %v841
  %v913 = vunpack.c.l.b16 %v842
  %v914 = vunpack.c.l.b16 %v843
  %v915 = vunpack.c.l.b16 %v844
  %v916 = vunpack.c.l.b16 %v845
  %v917 = vunpack.c.l.b16 %v846
  %v918 = vunpack.c.l.b16 %v847
  %v919 = vunpack.c.l.b16 %v848
  %v920 = vunpack.c.l.b16 %v849
  %v921 = vunpack.c.l.b16 %v850
  %v922 = vunpack.c.l.b16 %v851
  %v923 = vunpack.c.l.b16 %v852
  %v924 = vpack.c.b16 %v893, %v892
  %v925 = vpack.c.b16 %v895, %v894
  %v926 = vpack.c.b16 %v897, %v896
  %v927 = vpack.c.b16 %v899, %v898
  %v928 = vpack.c.b16 %v901, %v900
  %v929 = vpack.c.b16 %v903, %v902
  %v930 = vpack.c.b16 %v905, %v904
  %v931 = vpack.c.b16 %v907, %v906
  %v932 = vpack.c.b16 %v909, %v908
  %v933 = vpack.c.b16 %v911, %v910
  %v934 = vpack.c.b16 %v913, %v912
  %v935 = vpack.c.b16 %v915, %v914
  %v936 = vpack.c.b16 %v917, %v916
  %v937 = vpack.c.b16 %v919, %v918
  %v938 = vpack.c.b16 %v921, %v920
  %v939 = vpack.c.b16 %v923, %v922
  %956 = vmatprep.subr.bf16.mxu0 0
  %957 = vmatpush1.bf16.msra.mxu0 %v931
  %958 = vmatprep.subr.bf16.mxu0 0
  %959 = vmatpush1.bf16.msra.mxu0 %v930
  %960 = vmatprep.subr.bf16.mxu0 0
  %961 = vmatpush1.bf16.msra.mxu0 %v929
  %962 = vmatprep.subr.bf16.mxu0 0
  %963 = vmatpush1.bf16.msra.mxu0 %v928
  %964 = vmatprep.subr.bf16.mxu0 0
  %965 = vmatpush1.bf16.msra.mxu0 %v927
  %966 = vmatprep.subr.bf16.mxu0 0
  %967 = vmatpush1.bf16.msra.mxu0 %v926
  %968 = vmatprep.subr.bf16.mxu0 0
  %969 = vmatpush1.bf16.msra.mxu0 %v925
  %970 = vmatprep.subr.bf16.mxu0 0
  %971 = vmatpush1.bf16.msra.mxu0 %v924
  %972 = vmatprep.subr.bf16.mxu0 0
  %973 = vmatpush2.bf16.msra.mxu0 %v939
  %974 = vmatprep.subr.bf16.mxu0 0
  %975 = vmatpush2.bf16.msra.mxu0 %v938
  %976 = vmatprep.subr.bf16.mxu0 0
  %977 = vmatpush2.bf16.msra.mxu0 %v937
  %978 = vmatprep.subr.bf16.mxu0 0
  %979 = vmatpush2.bf16.msra.mxu0 %v936
  %980 = vmatprep.subr.bf16.mxu0 0
  %981 = vmatpush2.bf16.msra.mxu0 %v935
  %982 = vmatprep.subr.bf16.mxu0 0
  %983 = vmatpush2.bf16.msra.mxu0 %v934
  %984 = vmatprep.subr.bf16.mxu0 0
  %985 = vmatpush2.bf16.msra.mxu0 %v933
  %986 = vmatprep.subr.bf16.mxu0 0
  %987 = vmatpush2.bf16.msra.mxu0 %v932
  %988 = vmatprep.mubr.bf16.mxu0 %v820
  %989 = vmatmul.mubr.bf16.gmra.mxu0 %v819
  %v990 = vpop.f32.mrf.mxu0
  %v991 = vadd.f32 %v858, %v990
  %v992 = vpop.f32.mrf.mxu0
  %v993 = vpop.f32.mrf.mxu0
  %v994 = vpop.f32.mrf.mxu0
  %995 = vdwg.mxu0
  %996 = vmax.xlane.f32.xlu0 %v991
  %v997 = vpop.xlane.xlu0 %996
  %v998 = vsub.f32 %v991, %v997
  %v999 = vmul.f32 %v998, 1.442695
  %v1000 = vpow.pop %v999
  %1001 = vadd.xlane.f32.xlu0 %v1000
  %v1002 = vpop.xlane.xlu0 %1001
  %v1003 = vrcp.pop %v1002
  %v1004 = vmul.f32 %v1000, %v1003
  %1005 = vst [vmem:[%s5] sm:$0xff] %v1004
  // Predicated region
  $region22: #{feed_forward_net.1} parent=0 // pred_check
    _
  $region23: #{feed_forward_net.1} parent=0 // pred_check_branch
    %1007 = sbr.rel (0) target = $region25
  $region24: #{feed_forward_net.1} parent=0 // pred_region
    _
  $region25: #{feed_forward_net.1} parent=0 // pred_fallthru
    _
  // Predicated region
  $region26: #{feed_forward_net.1} parent=0 // pred_check
    _
  $region27: #{feed_forward_net.1} parent=0 // pred_check_branch
    %1009 = sbr.rel (0) target = $region29
  $region28: #{feed_forward_net.1} parent=0 // pred_region
    _
  $region29: #{feed_forward_net.1} parent=0 // pred_fallthru
    _

</llo_original>
